<compile_context>
chip_gen: v7x
topology: tpu7x:2x2x1
jax: 0.10.0
libtpu: 0.0.40
codegen_flags: <defaults>
</compile_context>

<pallas_src>
import jax
import jax.numpy as jnp
import numpy as np
from jax import lax
from jax.experimental import pallas as pl
from jax.experimental.pallas import tpu as pltpu

EPS = 1e-5


# ----------------------- fused Transition kernel -----------------------------
def _transition_kernel(xc_ref, q_ref, gamma_ref, beta_ref, wbig_ref, b2_ref,
                       o_ref):
    # xc_ref : (1, Mo, 8*C)  im2col'd input (8 stride-2 taps concatenated on lanes)
    # q_ref  : (8*C, 8*C)    group-averaging matrix (GroupNorm stats mixing)
    # gamma/beta_ref : (1, 8*C) per-column affine params (channel-tiled)
    # wbig_ref : (8*C, C2)   conv1 folded into the 2x2x2 stride-2 conv weights
    # b2_ref : (1, C2)       dnConv1 bias
    # o_ref  : (1, Mo, C2)
    xc = xc_ref[0]                                              # (Mo, 8C)

    # --- GroupNorm statistics, computed fully in-VMEM ------------------------
    # per-column (= per tap, per channel) moments over the Mo output voxels
    m_col = jnp.mean(xc, axis=0, keepdims=True)                 # (1, 8C)
    msq_col = jnp.mean(xc * xc, axis=0, keepdims=True)          # (1, 8C)
    # average the moments over each group's columns and broadcast back
    mean_g = jnp.dot(m_col, q_ref[...],
                     preferred_element_type=jnp.float32)        # (1, 8C)
    ex2_g = jnp.dot(msq_col, q_ref[...],
                    preferred_element_type=jnp.float32)         # (1, 8C)
    var_g = jnp.maximum(ex2_g - mean_g * mean_g, 0.0)
    inv_std = lax.rsqrt(var_g + EPS)                            # EUP slot
    scale = gamma_ref[...] * inv_std
    shift = beta_ref[...] - mean_g * scale

    # --- normalize + ReLU (VPU) ----------------------------------------------
    act = jnp.maximum(xc * scale + shift, 0.0)                  # (Mo, 8C)

    # --- conv1 (1x1x1, no bias) + dnConv1 (2x2x2 stride 2) as ONE matmul -----
    o_ref[0] = (
        jnp.dot(act, wbig_ref[...], preferred_element_type=jnp.float32)
        + b2_ref[...]
    )


# ------------------------------- wrapper -------------------------------------
def transition_forward(x_ncdhw, params):
    """x: (N, C, D, H, W) f32.  Returns (N, C2, D//2, H//2, W//2) f32."""
    N, C, D, H, W = x_ncdhw.shape
    G = 4 if C < 64 else 10
    cpg = C // G
    C2 = params["w2"].shape[0]
    # TODO(synk): odd spatial dims (PyTorch floor behavior) would need the
    #             GroupNorm stats taken over the full volume before cropping.
    assert D % 2 == 0 and H % 2 == 0 and W % 2 == 0
    Do, Ho, Wo = D // 2, H // 2, W // 2
    Mo = Do * Ho * Wo
    Cc = 8 * C                                   # im2col'd channel width

    # ---- host-side layout glue (pure XLA reshapes/transposes, done once) ----
    x_cl = jnp.transpose(x_ncdhw, (0, 2, 3, 4, 1)).astype(jnp.float32)  # NDHWC
    x_im = x_cl.reshape(N, Do, 2, Ho, 2, Wo, 2, C)
    x_im = jnp.transpose(x_im, (0, 1, 3, 5, 2, 4, 6, 7))   # (N,Do,Ho,Wo,kd,kh,kw,C)
    x_im = x_im.reshape(N, Mo, Cc)                          # col = ((kd*2+kh)*2+kw)*C+c

    # group-averaging matrix: Q[i, j] = 1/(8*cpg) iff channel(i), channel(j)
    # are in the same GroupNorm group (each group spans 8*cpg columns).
    ch = np.arange(Cc) % C
    grp = ch // cpg
    q = jnp.asarray((grp[:, None] == grp[None, :]).astype(np.float32)
                    / float(8 * cpg))
    gamma_col = jnp.tile(params["gamma"].astype(jnp.float32), 8).reshape(1, Cc)
    beta_col = jnp.tile(params["beta"].astype(jnp.float32), 8).reshape(1, Cc)

    # fold conv1 (bias=False -> linear) into the stride-2 conv weights:
    # Wbig[((kd*2+kh)*2+kw)*C + c, o] = sum_c1 w1[c1, c] * w2[o, c1, kd, kh, kw]
    wbig = jnp.einsum("ic,oidhw->dhwco",
                      params["w1"].astype(jnp.float32),
                      params["w2"].astype(jnp.float32)).reshape(Cc, C2)
    b2 = params["b2"].astype(jnp.float32).reshape(1, C2)

    out2d = pl.pallas_call(
        _transition_kernel,
        out_shape=jax.ShapeDtypeStruct((N, Mo, C2), jnp.float32),
        grid_spec=pltpu.PrefetchScalarGridSpec(
            num_scalar_prefetch=0,
            grid=(N,),
            in_specs=[
                pl.BlockSpec((1, Mo, Cc), lambda n: (n, 0, 0)),
                pl.BlockSpec((Cc, Cc), lambda n: (0, 0)),
                pl.BlockSpec((1, Cc), lambda n: (0, 0)),
                pl.BlockSpec((1, Cc), lambda n: (0, 0)),
                pl.BlockSpec((Cc, C2), lambda n: (0, 0)),
                pl.BlockSpec((1, C2), lambda n: (0, 0)),
            ],
            out_specs=pl.BlockSpec((1, Mo, C2), lambda n: (n, 0, 0)),
        ),
        compiler_params=pltpu.CompilerParams(
            dimension_semantics=("parallel",)),
    )(x_im, q, gamma_col, beta_col, wbig, b2)

    out = out2d.reshape(N, Do, Ho, Wo, C2)
    return jnp.transpose(out, (0, 4, 1, 2, 3))              # NDHWC -> NCDHW


# --------------------------- pure-JAX reference ------------------------------
def transition_reference(x, params):
    N, C, D, H, W = x.shape
    G = 4 if C < 64 else 10
    xg = x.astype(jnp.float32).reshape(N, G, C // G, D, H, W)
    mean = jnp.mean(xg, axis=(2, 3, 4, 5), keepdims=True)
    var = jnp.mean(jnp.square(xg - mean), axis=(2, 3, 4, 5), keepdims=True)
    xn = ((xg - mean) / jnp.sqrt(var + EPS)).reshape(N, C, D, H, W)
    xn = (xn * params["gamma"][None, :, None, None, None]
          + params["beta"][None, :, None, None, None])
    a = jnp.maximum(xn, 0.0)
    w1 = params["w1"][:, :, None, None, None]               # (O, I, 1, 1, 1)
    y1 = lax.conv_general_dilated(
        a, w1, (1, 1, 1), "VALID",
        dimension_numbers=("NCDHW", "OIDHW", "NCDHW"))
    y2 = lax.conv_general_dilated(
        y1, params["w2"], (2, 2, 2), "VALID",
        dimension_numbers=("NCDHW", "OIDHW", "NCDHW"))
    return y2 + params["b2"][None, :, None, None, None]


if __name__ == "__main__":
    # Transition(nChannels=4, nOutChannels=8) on a small 3D volume.
    N, C, D, H, W = 2, 4, 8, 8, 8
    nOut = 8

    key = jax.random.PRNGKey(0)
    ks = jax.random.split(key, 6)
    params = {
        "gamma": 1.0 + 0.1 * jax.random.normal(ks[0], (C,), jnp.float32),
        "beta": 0.1 * jax.random.normal(ks[1], (C,), jnp.float32),
        # conv1: Conv3d(C, nOut, 1, bias=False) weight (O, I) (1x1x1 squeezed)
        "w1": jax.random.normal(ks[2], (nOut, C), jnp.float32) / np.sqrt(C),
        # dnConv1: Conv3d(nOut, nOut, 2, stride=2) weight (O, I, kD, kH, kW)
        "w2": jax.random.normal(ks[3], (nOut, nOut, 2, 2, 2), jnp.float32)
              / np.sqrt(8 * nOut),
        "b2": 0.1 * jax.random.normal(ks[4], (nOut,), jnp.float32),
    }
    x = jax.random.normal(ks[5], (N, C, D, H, W), jnp.float32)

    out = jax.block_until_ready(transition_forward(x, params))
    ref = jax.block_until_ready(transition_reference(x, params))

    assert out.shape == (N, nOut, D // 2, H // 2, W // 2), out.shape
    np.testing.assert_allclose(np.asarray(out), np.asarray(ref),
                               rtol=1e-4, atol=1e-4)
    print("KERNEL_OK")
</pallas_src>

<mosaic_0001>
module attributes {stable_mosaic.version = 11 : i64} {
  func.func @_transition_kernel(%arg0: i32, %arg1: memref<1x64x32xf32, #tpu.memory_space<vmem>>, %arg2: memref<32x32xf32, #tpu.memory_space<vmem>>, %arg3: memref<1x32xf32, #tpu.memory_space<vmem>>, %arg4: memref<1x32xf32, #tpu.memory_space<vmem>>, %arg5: memref<32x8xf32, #tpu.memory_space<vmem>>, %arg6: memref<1x8xf32, #tpu.memory_space<vmem>>, %arg7: memref<1x64x8xf32, #tpu.memory_space<vmem>>) attributes {dimension_semantics = [#tpu.dimension_semantics<parallel>], iteration_bounds = array<i64: 2>, scalar_prefetch = 0 : i64, scratch_operands = 0 : i64, tpu.core_type = #tpu.core_type<tc>, window_params = [{transform_indices = @transform_0, window_bounds = array<i64: 1, 64, 32>}, {pipeline_mode = #tpu.pipeline_mode<synchronous>, transform_indices = @transform_1, window_bounds = array<i64: 32, 32>}, {pipeline_mode = #tpu.pipeline_mode<synchronous>, transform_indices = @transform_2, window_bounds = array<i64: 1, 32>}, {pipeline_mode = #tpu.pipeline_mode<synchronous>, transform_indices = @transform_3, window_bounds = array<i64: 1, 32>}, {pipeline_mode = #tpu.pipeline_mode<synchronous>, transform_indices = @transform_4, window_bounds = array<i64: 32, 8>}, {pipeline_mode = #tpu.pipeline_mode<synchronous>, transform_indices = @transform_5, window_bounds = array<i64: 1, 8>}, {transform_indices = @transform_6, window_bounds = array<i64: 1, 64, 8>}]} {
    %c0 = arith.constant 0 : index
    %c0_0 = arith.constant 0 : index
    %c0_1 = arith.constant 0 : index
    %0 = vector.load %arg1[%c0, %c0_0, %c0_1] : memref<1x64x32xf32, #tpu.memory_space<vmem>>, vector<1x64x32xf32>
    %1 = vector.shape_cast %0 : vector<1x64x32xf32> to vector<64x32xf32>
    %cst = arith.constant dense<0.000000e+00> : vector<32xf32>
    %2 = vector.multi_reduction <add>, %1, %cst [0] : vector<64x32xf32> to vector<32xf32>
    %3 = vector.shape_cast %2 : vector<32xf32> to vector<1x32xf32>
    %cst_2 = arith.constant 6.400000e+01 : f32
    %4 = vector.broadcast %cst_2 : f32 to vector<1x32xf32>
    %5 = arith.divf %3, %4 : vector<1x32xf32>
    %6 = arith.mulf %1, %1 : vector<64x32xf32>
    %cst_3 = arith.constant dense<0.000000e+00> : vector<32xf32>
    %7 = vector.multi_reduction <add>, %6, %cst_3 [0] : vector<64x32xf32> to vector<32xf32>
    %8 = vector.shape_cast %7 : vector<32xf32> to vector<1x32xf32>
    %cst_4 = arith.constant 6.400000e+01 : f32
    %9 = vector.broadcast %cst_4 : f32 to vector<1x32xf32>
    %10 = arith.divf %8, %9 : vector<1x32xf32>
    %c0_5 = arith.constant 0 : index
    %c0_6 = arith.constant 0 : index
    %11 = vector.load %arg2[%c0_5, %c0_6] : memref<32x32xf32, #tpu.memory_space<vmem>>, vector<32x32xf32>
    %cst_7 = arith.constant dense<0.000000e+00> : vector<1x32xf32>
    %12 = tpu.matmul %5, %11, %cst_7 {dimension_numbers = #tpu.dot_dimension_numbers<[1], [0], [0], [1], [0, 0, 1, 1], [], []>} : vector<1x32xf32>, vector<32x32xf32>, vector<1x32xf32> -> vector<1x32xf32>
    %c0_8 = arith.constant 0 : index
    %c0_9 = arith.constant 0 : index
    %13 = vector.load %arg2[%c0_8, %c0_9] : memref<32x32xf32, #tpu.memory_space<vmem>>, vector<32x32xf32>
    %cst_10 = arith.constant dense<0.000000e+00> : vector<1x32xf32>
    %14 = tpu.matmul %10, %13, %cst_10 {dimension_numbers = #tpu.dot_dimension_numbers<[1], [0], [0], [1], [0, 0, 1, 1], [], []>} : vector<1x32xf32>, vector<32x32xf32>, vector<1x32xf32> -> vector<1x32xf32>
    %15 = arith.mulf %12, %12 : vector<1x32xf32>
    %16 = arith.subf %14, %15 : vector<1x32xf32>
    %cst_11 = arith.constant 0.000000e+00 : f32
    %17 = vector.broadcast %cst_11 : f32 to vector<1x32xf32>
    %18 = arith.maximumf %16, %17 : vector<1x32xf32>
    %cst_12 = arith.constant 9.99999974E-6 : f32
    %19 = vector.broadcast %cst_12 : f32 to vector<1x32xf32>
    %20 = arith.addf %18, %19 : vector<1x32xf32>
    %21 = math.rsqrt %20 : vector<1x32xf32>
    %c0_13 = arith.constant 0 : index
    %c0_14 = arith.constant 0 : index
    %22 = vector.load %arg3[%c0_13, %c0_14] : memref<1x32xf32, #tpu.memory_space<vmem>>, vector<1x32xf32>
    %23 = arith.mulf %22, %21 : vector<1x32xf32>
    %c0_15 = arith.constant 0 : index
    %c0_16 = arith.constant 0 : index
    %24 = vector.load %arg4[%c0_15, %c0_16] : memref<1x32xf32, #tpu.memory_space<vmem>>, vector<1x32xf32>
    %25 = arith.mulf %12, %23 : vector<1x32xf32>
    %26 = arith.subf %24, %25 : vector<1x32xf32>
    %27 = vector.broadcast %23 : vector<1x32xf32> to vector<64x32xf32>
    %28 = arith.mulf %1, %27 : vector<64x32xf32>
    %29 = vector.broadcast %26 : vector<1x32xf32> to vector<64x32xf32>
    %30 = arith.addf %28, %29 : vector<64x32xf32>
    %cst_17 = arith.constant 0.000000e+00 : f32
    %31 = vector.broadcast %cst_17 : f32 to vector<64x32xf32>
    %32 = arith.maximumf %30, %31 : vector<64x32xf32>
    %c0_18 = arith.constant 0 : index
    %c0_19 = arith.constant 0 : index
    %33 = vector.load %arg5[%c0_18, %c0_19] : memref<32x8xf32, #tpu.memory_space<vmem>>, vector<32x8xf32>
    %cst_20 = arith.constant dense<0.000000e+00> : vector<64x8xf32>
    %34 = tpu.matmul %32, %33, %cst_20 {dimension_numbers = #tpu.dot_dimension_numbers<[1], [0], [0], [1], [0, 0, 1, 1], [], []>} : vector<64x32xf32>, vector<32x8xf32>, vector<64x8xf32> -> vector<64x8xf32>
    %c0_21 = arith.constant 0 : index
    %c0_22 = arith.constant 0 : index
    %35 = vector.load %arg6[%c0_21, %c0_22] : memref<1x8xf32, #tpu.memory_space<vmem>>, vector<1x8xf32>
    %36 = vector.broadcast %35 : vector<1x8xf32> to vector<64x8xf32>
    %37 = arith.addf %34, %36 : vector<64x8xf32>
    %c0_23 = arith.constant 0 : index
    %c0_24 = arith.constant 0 : index
    %c0_25 = arith.constant 0 : index
    %38 = vector.load %arg7[%c0_23, %c0_24, %c0_25] : memref<1x64x8xf32, #tpu.memory_space<vmem>>, vector<1x64x8xf32>
    %39 = vector.shape_cast %38 : vector<1x64x8xf32> to vector<64x8xf32>
    %40 = vector.shape_cast %37 : vector<64x8xf32> to vector<1x64x8xf32>
    tpu.vector_store %arg7[%c0_23, %c0_24, %c0_25], %40 {strides = array<i32>} : memref<1x64x8xf32, #tpu.memory_space<vmem>>, vector<1x64x8xf32>,
    return
  }
  func.func @transform_0(%arg0: i32) -> (i32, i32, i32) {
    %c0_i32 = arith.constant 0 : i32
    %c0_i32_0 = arith.constant 0 : i32
    %c0_i32_1 = arith.constant 0 : i32
    return %arg0, %c0_i32, %c0_i32_0 : i32, i32, i32
  }
  func.func @transform_1(%arg0: i32) -> (i32, i32) {
    %c0_i32 = arith.constant 0 : i32
    %c0_i32_0 = arith.constant 0 : i32
    %c0_i32_1 = arith.constant 0 : i32
    return %c0_i32, %c0_i32_0 : i32, i32
  }
  func.func @transform_2(%arg0: i32) -> (i32, i32) {
    %c0_i32 = arith.constant 0 : i32
    %c0_i32_0 = arith.constant 0 : i32
    %c0_i32_1 = arith.constant 0 : i32
    return %c0_i32, %c0_i32_0 : i32, i32
  }
  func.func @transform_3(%arg0: i32) -> (i32, i32) {
    %c0_i32 = arith.constant 0 : i32
    %c0_i32_0 = arith.constant 0 : i32
    %c0_i32_1 = arith.constant 0 : i32
    return %c0_i32, %c0_i32_0 : i32, i32
  }
  func.func @transform_4(%arg0: i32) -> (i32, i32) {
    %c0_i32 = arith.constant 0 : i32
    %c0_i32_0 = arith.constant 0 : i32
    %c0_i32_1 = arith.constant 0 : i32
    return %c0_i32, %c0_i32_0 : i32, i32
  }
  func.func @transform_5(%arg0: i32) -> (i32, i32) {
    %c0_i32 = arith.constant 0 : i32
    %c0_i32_0 = arith.constant 0 : i32
    %c0_i32_1 = arith.constant 0 : i32
    return %c0_i32, %c0_i32_0 : i32, i32
  }
  func.func @transform_6(%arg0: i32) -> (i32, i32, i32) {
    %c0_i32 = arith.constant 0 : i32
    %c0_i32_0 = arith.constant 0 : i32
    %c0_i32_1 = arith.constant 0 : i32
    return %arg0, %c0_i32, %c0_i32_0 : i32, i32, i32
  }
}

</mosaic_0001>

<llo_original>
// kernel: tpu_custom_call.1
$region0: #{tpu_custom_call.1}
  #allocation0 [shape = 'u32[]', space=smem, size = 0x4, offset = 0x4, fixed_abs, tag = 'smem constant byte address 0x4 - core index']
  #allocation1 [shape = 'u32[144,128]{1,0:T(1,128)}', space=vmem, size = 0x12000, scoped, tag = 'internal scratch']
  %s0 = inlined_call_operand.vmem [shape: f32[2,64,32], index: 0, kind: input, shape index: {}]
  %s1 = inlined_call_operand.vmem [shape: f32[32,32], index: 1, kind: input, shape index: {}]
  %s2 = inlined_call_operand.vmem [shape: f32[1,32], index: 2, kind: input, shape index: {}]
  %s3 = inlined_call_operand.vmem [shape: f32[1,32], index: 3, kind: input, shape index: {}]
  %s4 = inlined_call_operand.vmem [shape: f32[32,8], index: 4, kind: input, shape index: {}]
  %s5 = inlined_call_operand.vmem [shape: f32[1,8], index: 5, kind: input, shape index: {}]
  %s6 = inlined_call_operand.vmem [shape: f32[2,64,8], index: 6, kind: output, shape index: {}]
  %s7 = sld [smem:[#allocation0]]
  $region57: #{tpu_custom_call.1} parent=0
    _
  %s9 = ssub.s32 1, %s7
  %s10 = scalar_select 0, %s9, %s7
  loop: start=0, step=1, limit=4
  $region2: #{tpu_custom_call.1} parent=0 // loop_pre_header
    _
  $region3: #{tpu_custom_call.1} parent=0 // loop_header
    %s12 = sphi 0, %s16
    %p13 = scmp.ge.s32.totalorder %s12, 4
    %s22 = sphi 0, %s24
    %s25 = sphi 0, %s22
    %s26 = sphi 0, %s25
    %s42 = sphi 0, %s26
    %s46 = sphi 0, %s46
    %s48 = sphi 0, %s46
    %s49 = sphi 0, %s48
    %s63 = sphi 0, %s49
    %s67 = sphi 0, %s67
    %s69 = sphi 0, %s67
    %s70 = sphi 0, %s69
    %s84 = sphi 0, %s70
    %s88 = sphi 0, %s88
    %s90 = sphi 0, %s88
    %s91 = sphi 0, %s90
    %s105 = sphi 0, %s91
    %s109 = sphi 0, %s109
    %s111 = sphi 0, %s109
    %s112 = sphi 0, %s111
    %s126 = sphi 0, %s112
    %s130 = sphi 0, %s130
    %s132 = sphi 0, %s130
    %s133 = sphi 0, %s132
    %s147 = sphi 0, %s133
    %s153 = sphi 0, %s155
    %s156 = sphi 0, %s153
    %s157 = sphi 0, %s156
    %s173 = sphi 0, %s157
  $region4: #{tpu_custom_call.1} parent=0 // loop_header_branch
    %15 = sbr.rel (%p13) target = $region8
  $region5: #{tpu_custom_call.1} parent=0 // loop_body
    %s17 = ssub.s32 %s12, 1
    %s18 = ssub.s32 %s12, 2
    %s19 = sadd.s32 %s12, 1
    %s20 = ssub.s32 %s12, %s19
    %p21 = scmp.eq.s32.totalorder %s20, 0
    %s23 = sadd.s32 %s22, 1
    %s24 = scalar_select %p21, %s22, %s23
    %p27 = pneg %p21
    %p28 = scmp.eq.s32.totalorder %s12, 1
    %p29 = por %p27, %p28
    %p30 = scmp.ne.s32.totalorder %s22, %s25
    %p31 = scmp.eq.s32.totalorder %s12, 0
    %p32 = por %p30, %p31
    %p33 = scmp.ne.s32.totalorder %s22, %s25
    %p34 = scmp.eq.s32.totalorder %s17, 1
    %p35 = por %p33, %p34
    %p36 = scmp.ne.s32.totalorder %s25, %s26
    %p37 = scmp.eq.s32.totalorder %s17, 0
    %p38 = por %p36, %p37
    %p39 = scmp.ne.s32.totalorder %s25, %s26
    %p40 = scmp.eq.s32.totalorder %s18, 1
    %p41 = por %p39, %p40
    %p43 = scmp.ne.s32.totalorder %s26, %s42
    %p44 = scmp.eq.s32.totalorder %s18, 0
    %p45 = por %p43, %p44
    %s47 = sadd.s32 %s46, 1
    %p50 = scmp.eq.s32.totalorder %s12, 1
    %p51 = scmp.ne.s32.totalorder %s46, %s48
    %p52 = scmp.eq.s32.totalorder %s12, 0
    %p53 = por %p51, %p52
    %p54 = scmp.ne.s32.totalorder %s46, %s48
    %p55 = scmp.eq.s32.totalorder %s17, 1
    %p56 = por %p54, %p55
    %p57 = scmp.ne.s32.totalorder %s48, %s49
    %p58 = scmp.eq.s32.totalorder %s17, 0
    %p59 = por %p57, %p58
    %p60 = scmp.ne.s32.totalorder %s48, %s49
    %p61 = scmp.eq.s32.totalorder %s18, 1
    %p62 = por %p60, %p61
    %p64 = scmp.ne.s32.totalorder %s49, %s63
    %p65 = scmp.eq.s32.totalorder %s18, 0
    %p66 = por %p64, %p65
    %s68 = sadd.s32 %s67, 1
    %p71 = scmp.eq.s32.totalorder %s12, 1
    %p72 = scmp.ne.s32.totalorder %s67, %s69
    %p73 = scmp.eq.s32.totalorder %s12, 0
    %p74 = por %p72, %p73
    %p75 = scmp.ne.s32.totalorder %s67, %s69
    %p76 = scmp.eq.s32.totalorder %s17, 1
    %p77 = por %p75, %p76
    %p78 = scmp.ne.s32.totalorder %s69, %s70
    %p79 = scmp.eq.s32.totalorder %s17, 0
    %p80 = por %p78, %p79
    %p81 = scmp.ne.s32.totalorder %s69, %s70
    %p82 = scmp.eq.s32.totalorder %s18, 1
    %p83 = por %p81, %p82
    %p85 = scmp.ne.s32.totalorder %s70, %s84
    %p86 = scmp.eq.s32.totalorder %s18, 0
    %p87 = por %p85, %p86
    %s89 = sadd.s32 %s88, 1
    %p92 = scmp.eq.s32.totalorder %s12, 1
    %p93 = scmp.ne.s32.totalorder %s88, %s90
    %p94 = scmp.eq.s32.totalorder %s12, 0
    %p95 = por %p93, %p94
    %p96 = scmp.ne.s32.totalorder %s88, %s90
    %p97 = scmp.eq.s32.totalorder %s17, 1
    %p98 = por %p96, %p97
    %p99 = scmp.ne.s32.totalorder %s90, %s91
    %p100 = scmp.eq.s32.totalorder %s17, 0
    %p101 = por %p99, %p100
    %p102 = scmp.ne.s32.totalorder %s90, %s91
    %p103 = scmp.eq.s32.totalorder %s18, 1
    %p104 = por %p102, %p103
    %p106 = scmp.ne.s32.totalorder %s91, %s105
    %p107 = scmp.eq.s32.totalorder %s18, 0
    %p108 = por %p106, %p107
    %s110 = sadd.s32 %s109, 1
    %p113 = scmp.eq.s32.totalorder %s12, 1
    %p114 = scmp.ne.s32.totalorder %s109, %s111
    %p115 = scmp.eq.s32.totalorder %s12, 0
    %p116 = por %p114, %p115
    %p117 = scmp.ne.s32.totalorder %s109, %s111
    %p118 = scmp.eq.s32.totalorder %s17, 1
    %p119 = por %p117, %p118
    %p120 = scmp.ne.s32.totalorder %s111, %s112
    %p121 = scmp.eq.s32.totalorder %s17, 0
    %p122 = por %p120, %p121
    %p123 = scmp.ne.s32.totalorder %s111, %s112
    %p124 = scmp.eq.s32.totalorder %s18, 1
    %p125 = por %p123, %p124
    %p127 = scmp.ne.s32.totalorder %s112, %s126
    %p128 = scmp.eq.s32.totalorder %s18, 0
    %p129 = por %p127, %p128
    %s131 = sadd.s32 %s130, 1
    %p134 = scmp.eq.s32.totalorder %s12, 1
    %p135 = scmp.ne.s32.totalorder %s130, %s132
    %p136 = scmp.eq.s32.totalorder %s12, 0
    %p137 = por %p135, %p136
    %p138 = scmp.ne.s32.totalorder %s130, %s132
    %p139 = scmp.eq.s32.totalorder %s17, 1
    %p140 = por %p138, %p139
    %p141 = scmp.ne.s32.totalorder %s132, %s133
    %p142 = scmp.eq.s32.totalorder %s17, 0
    %p143 = por %p141, %p142
    %p144 = scmp.ne.s32.totalorder %s132, %s133
    %p145 = scmp.eq.s32.totalorder %s18, 1
    %p146 = por %p144, %p145
    %p148 = scmp.ne.s32.totalorder %s133, %s147
    %p149 = scmp.eq.s32.totalorder %s18, 0
    %p150 = por %p148, %p149
    %s151 = ssub.s32 %s12, %s19
    %p152 = scmp.eq.s32.totalorder %s151, 0
    %s154 = sadd.s32 %s153, 1
    %s155 = scalar_select %p152, %s153, %s154
    %p158 = pneg %p152
    %p159 = scmp.eq.s32.totalorder %s12, 1
    %p160 = por %p158, %p159
    %p161 = scmp.ne.s32.totalorder %s153, %s156
    %p162 = scmp.eq.s32.totalorder %s12, 0
    %p163 = por %p161, %p162
    %p164 = scmp.ne.s32.totalorder %s153, %s156
    %p165 = scmp.eq.s32.totalorder %s17, 1
    %p166 = por %p164, %p165
    %p167 = scmp.ne.s32.totalorder %s156, %s157
    %p168 = scmp.eq.s32.totalorder %s17, 0
    %p169 = por %p167, %p168
    %p170 = scmp.ne.s32.totalorder %s156, %s157
    %p171 = scmp.eq.s32.totalorder %s18, 1
    %p172 = por %p170, %p171
    %p174 = scmp.ne.s32.totalorder %s157, %s173
    %p175 = scmp.eq.s32.totalorder %s18, 0
    %p176 = por %p174, %p175
    %p177 = scmp.le.s32.totalorder 1, %s12
    %p178 = scmp.lt.s32.totalorder %s12, 3
    %p179 = pnand %p177, %p178
    %p180 = pneg %p179
    // Predicated region
    $region9: #{tpu_custom_call.1} parent=5 // pred_check
      _
    $region10: #{tpu_custom_call.1} parent=5 // pred_check_branch
      %182 = sbr.rel (%p179) target = $region12
    $region11: #{tpu_custom_call.1} parent=5 // pred_region
      %s183 = ssub.s32 %s12, 1
      // Predicated region
      $region13: #{tpu_custom_call.1} parent=11 // pred_check
        %p184 = pneg %p59
      $region14: #{tpu_custom_call.1} parent=11 // pred_check_branch
        %186 = sbr.rel (%p184) target = $region16
      $region15: #{tpu_custom_call.1} parent=11 // pred_region
        _
      $region16: #{tpu_custom_call.1} parent=11 // pred_fallthru
        _
      // Predicated region
      $region17: #{tpu_custom_call.1} parent=11 // pred_check
        %p187 = pneg %p80
      $region18: #{tpu_custom_call.1} parent=11 // pred_check_branch
        %189 = sbr.rel (%p187) target = $region20
      $region19: #{tpu_custom_call.1} parent=11 // pred_region
        _
      $region20: #{tpu_custom_call.1} parent=11 // pred_fallthru
        _
      // Predicated region
      $region21: #{tpu_custom_call.1} parent=11 // pred_check
        %p190 = pneg %p101
      $region22: #{tpu_custom_call.1} parent=11 // pred_check_branch
        %192 = sbr.rel (%p190) target = $region24
      $region23: #{tpu_custom_call.1} parent=11 // pred_region
        _
      $region24: #{tpu_custom_call.1} parent=11 // pred_fallthru
        _
      // Predicated region
      $region25: #{tpu_custom_call.1} parent=11 // pred_check
        %p193 = pneg %p122
      $region26: #{tpu_custom_call.1} parent=11 // pred_check_branch
        %195 = sbr.rel (%p193) target = $region28
      $region27: #{tpu_custom_call.1} parent=11 // pred_region
        _
      $region28: #{tpu_custom_call.1} parent=11 // pred_fallthru
        _
      // Predicated region
      $region29: #{tpu_custom_call.1} parent=11 // pred_check
        %p196 = pneg %p143
      $region30: #{tpu_custom_call.1} parent=11 // pred_check_branch
        %198 = sbr.rel (%p196) target = $region32
      $region31: #{tpu_custom_call.1} parent=11 // pred_region
        _
      $region32: #{tpu_custom_call.1} parent=11 // pred_fallthru
        _
    $region12: #{tpu_custom_call.1} parent=5 // pred_fallthru
      _
    %p199 = scmp.lt.s32.totalorder %s12, 2
    // Predicated region
    $region33: #{tpu_custom_call.1} parent=5 // pred_check
      %p200 = pneg %p199
    $region34: #{tpu_custom_call.1} parent=5 // pred_check_branch
      %202 = sbr.rel (%p200) target = $region36
    $region35: #{tpu_custom_call.1} parent=5 // pred_region
      // Predicated region
      $region37: #{tpu_custom_call.1} parent=35 // pred_check
        %p203 = pneg %p32
      $region38: #{tpu_custom_call.1} parent=35 // pred_check_branch
        %205 = sbr.rel (%p203) target = $region40
      $region39: #{tpu_custom_call.1} parent=35 // pred_region
        %p206 = scmp.lt.s32.totalorder %s12, 1
        %s207 = scalar_select %p206, %s12, 1
        %s208 = smul.addr %s207, 8
        %s209 = smul.addr %s208, 8
        %s210 = scalar_lea.vmem %s0, %s209
      $region40: #{tpu_custom_call.1} parent=35 // pred_fallthru
        _
    $region36: #{tpu_custom_call.1} parent=5 // pred_fallthru
      _
    %p211 = scmp.le.s32.totalorder 1, %s12
    %p212 = scmp.lt.s32.totalorder %s12, 3
    %p213 = pnand %p211, %p212
    %p214 = pneg %p213
    // Predicated region
    $region41: #{tpu_custom_call.1} parent=5 // pred_check
      _
    $region42: #{tpu_custom_call.1} parent=5 // pred_check_branch
      %216 = sbr.rel (%p213) target = $region44
    $region43: #{tpu_custom_call.1} parent=5 // pred_region
      %s217 = ssub.s32 %s12, 1
      %p218 = scmp.lt.s32.totalorder %s17, 1
      %s219 = scalar_select %p218, %s17, 1
      %s220 = smul.addr %s219, 8
      %s221 = smul.addr %s220, 8
      %s222 = scalar_lea.vmem %s0, %s221
      %p223 = pneg %p38
      %p224 = pneg %p35
      %p225 = pneg %p59
      %p226 = pneg %p56
      %p227 = pneg %p80
      %p228 = pneg %p77
      %p229 = pneg %p101
      %p230 = pneg %p98
      %p231 = pneg %p122
      %p232 = pneg %p119
      %p233 = pneg %p143
      %p234 = pneg %p140
      %p235 = pneg %p169
      %p236 = pneg %p166
      %p237 = scmp.lt.s32.totalorder %s17, 1
      %s238 = scalar_select %p237, %s17, 1
      %s239 = smul.addr %s238, 8
      %s240 = smul.addr %s239, 8
      %s241 = scalar_lea.vmem %s6, %s240
      %p242 = scmp.lt.s32.totalorder %s17, 1
      %s243 = scalar_select %p242, %s17, 1
      %s244 = smul.addr %s243, 8
      %s245 = smul.addr %s244, 8
      %s246 = scalar_lea.vmem %s0, %s245
      %p247 = scmp.lt.s32.totalorder %s17, 1
      %s248 = scalar_select %p247, %s17, 1
      %s249 = smul.addr %s248, 8
      %s250 = smul.addr %s249, 8
      %s251 = scalar_lea.vmem %s6, %s250
      %v252 = vld [vmem:[%s246] sm:$0xff]
      %v253 = vld [vmem:[%s246 + $0x8] sm:$0xff]
      %v254 = vld [vmem:[%s246 + $0x10] sm:$0xff]
      %v255 = vld [vmem:[%s246 + $0x18] sm:$0xff]
      %v256 = vld [vmem:[%s246 + $0x20] sm:$0xff]
      %v257 = vld [vmem:[%s246 + $0x28] sm:$0xff]
      %v258 = vld [vmem:[%s246 + $0x30] sm:$0xff]
      %v259 = vld [vmem:[%s246 + $0x38] sm:$0xff]
      %vm260 = vcmask 261120
      %v261 = vsel %vm260, %v252, 0.0
      %v262 = vsel %vm260, %v253, 0.0
      %v263 = vadd.f32 %v261, %v262
      %v264 = vsel %vm260, %v254, 0.0
      %v265 = vadd.f32 %v263, %v264
      %v266 = vsel %vm260, %v255, 0.0
      %v267 = vadd.f32 %v265, %v266
      %v268 = vsel %vm260, %v256, 0.0
      %v269 = vadd.f32 %v267, %v268
      %v270 = vsel %vm260, %v257, 0.0
      %v271 = vadd.f32 %v269, %v270
      %v272 = vsel %vm260, %v258, 0.0
      %v273 = vadd.f32 %v271, %v272
      %v274 = vsel %vm260, %v259, 0.0
      %v275 = vadd.f32 %v273, %v274
      %v276 = vrot.slane %v275, 4
      %v277 = vadd.f32 %v275, %v276
      %v278 = vrot.slane %v277, 2
      %v279 = vadd.f32 %v277, %v278
      %v280 = vrot.slane %v279, 1
      %v281 = vadd.f32 %v279, %v280
      %v282 = vrcp.pop 64.0
      %v283 = vmul.f32 %v281, %v282
      %v284 = vmul.f32 %v252, %v252
      %v285 = vmul.f32 %v253, %v253
      %v286 = vmul.f32 %v254, %v254
      %v287 = vmul.f32 %v255, %v255
      %v288 = vmul.f32 %v256, %v256
      %v289 = vmul.f32 %v257, %v257
      %v290 = vmul.f32 %v258, %v258
      %v291 = vmul.f32 %v259, %v259
      %v292 = vsel %vm260, %v284, 0.0
      %v293 = vsel %vm260, %v285, 0.0
      %v294 = vadd.f32 %v292, %v293
      %v295 = vsel %vm260, %v286, 0.0
      %v296 = vadd.f32 %v294, %v295
      %v297 = vsel %vm260, %v287, 0.0
      %v298 = vadd.f32 %v296, %v297
      %v299 = vsel %vm260, %v288, 0.0
      %v300 = vadd.f32 %v298, %v299
      %v301 = vsel %vm260, %v289, 0.0
      %v302 = vadd.f32 %v300, %v301
      %v303 = vsel %vm260, %v290, 0.0
      %v304 = vadd.f32 %v302, %v303
      %v305 = vsel %vm260, %v291, 0.0
      %v306 = vadd.f32 %v304, %v305
      %v307 = vrot.slane %v306, 4
      %v308 = vadd.f32 %v306, %v307
      %v309 = vrot.slane %v308, 2
      %v310 = vadd.f32 %v308, %v309
      %v311 = vrot.slane %v310, 1
      %v312 = vadd.f32 %v310, %v311
      %v313 = vmul.f32 %v312, %v282
      %v314 = vld [vmem:[%s1] sm:$0xff]
      %v315 = vld [vmem:[%s1 + $0x8] sm:$0xff]
      %v316 = vld [vmem:[%s1 + $0x10] sm:$0xff]
      %v317 = vld [vmem:[%s1 + $0x18] sm:$0xff]
      %v319 = vsel %vm260, %v283, 0
      %321 = vmatprep.subr.mxu0 0.0
      %322 = vmatpush1.msra.mxu0 %v314
      %323 = vmatprep.subr.mxu0 0.0
      %324 = vmatpush1.msra.mxu0 %v315
      %325 = vmatprep.subr.mxu0 0.0
      %326 = vmatpush1.msra.mxu0 %v316
      %327 = vmatprep.subr.mxu0 0.0
      %328 = vmatpush1.msra.mxu0 %v317
      %329 = vmatprep.subr.mxu0 0.0
      %330 = vmatpush1.msra.mxu0 0.0
      %331 = vmatprep.subr.mxu0 0.0
      %332 = vmatpush1.msra.mxu0 0.0
      %333 = vmatprep.subr.mxu0 0.0
      %334 = vmatpush1.msra.mxu0 0.0
      %335 = vmatprep.subr.mxu0 0.0
      %336 = vmatpush1.msra.mxu0 0.0
      %337 = vmatprep.subr.mxu0 0.0
      %338 = vmatpush1.msra.mxu0 0.0
      %339 = vmatprep.subr.mxu0 0.0
      %340 = vmatpush1.msra.mxu0 0.0
      %341 = vmatprep.subr.mxu0 0.0
      %342 = vmatpush1.msra.mxu0 0.0
      %343 = vmatprep.subr.mxu0 0.0
      %344 = vmatpush1.msra.mxu0 0.0
      %345 = vmatprep.subr.mxu0 0.0
      %346 = vmatpush1.msra.mxu0 0.0
      %347 = vmatprep.subr.mxu0 0.0
      %348 = vmatpush1.msra.mxu0 0.0
      %349 = vmatprep.subr.mxu0 0.0
      %350 = vmatpush1.msra.mxu0 0.0
      %351 = vmatprep.subr.mxu0 0.0
      %352 = vmatpush1.msra.mxu0 0.0
      %353 = vmatprep.subr.mxu0 0.0
      %354 = vmatpush1.msra.mxu0 0.0
      %355 = vmatprep.subr.mxu0 0.0
      %356 = vmatpush1.msra.mxu0 0.0
      %357 = vmatprep.subr.mxu0 0.0
      %358 = vmatpush1.msra.mxu0 0.0
      %359 = vmatprep.subr.mxu0 0.0
      %360 = vmatpush1.msra.mxu0 0.0
      %361 = vmatprep.subr.mxu0 0.0
      %362 = vmatpush1.msra.mxu0 0.0
      %363 = vmatprep.subr.mxu0 0.0
      %364 = vmatpush1.msra.mxu0 0.0
      %365 = vmatprep.subr.mxu0 0.0
      %366 = vmatpush1.msra.mxu0 0.0
      %367 = vmatprep.subr.mxu0 0.0
      %368 = vmatpush1.msra.mxu0 0.0
      %369 = vmatprep.subr.mxu0 0.0
      %370 = vmatpush1.msra.mxu0 0.0
      %371 = vmatprep.subr.mxu0 0.0
      %372 = vmatpush1.msra.mxu0 0.0
      %373 = vmatprep.subr.mxu0 0.0
      %374 = vmatpush1.msra.mxu0 0.0
      %375 = vmatprep.subr.mxu0 0.0
      %376 = vmatpush1.msra.mxu0 0.0
      %377 = vmatprep.subr.mxu0 0.0
      %378 = vmatpush1.msra.mxu0 0.0
      %379 = vmatprep.subr.mxu0 0.0
      %380 = vmatpush1.msra.mxu0 0.0
      %381 = vmatprep.subr.mxu0 0.0
      %382 = vmatpush1.msra.mxu0 0.0
      %383 = vmatprep.subr.mxu0 0.0
      %384 = vmatpush1.msra.mxu0 0.0
      %385 = vmatprep.mubr.f32.mxu0 0.0
      %386 = vmatmul.mubr.f32.gmra.mrb[0].mxu0 %v319
      %v387 = vpop.f32.mrb[0].mxu0
      %v388 = vadd.f32 0.0, %v387
      %v389 = vpop.f32.mrb[0].mxu0
      %390 = vdwg.mxu0
      %v392 = vsel %vm260, %v313, 0
      %394 = vmatprep.subr.mxu0 0.0
      %395 = vmatpush1.msra.mxu0 %v314
      %396 = vmatprep.subr.mxu0 0.0
      %397 = vmatpush1.msra.mxu0 %v315
      %398 = vmatprep.subr.mxu0 0.0
      %399 = vmatpush1.msra.mxu0 %v316
      %400 = vmatprep.subr.mxu0 0.0
      %401 = vmatpush1.msra.mxu0 %v317
      %402 = vmatprep.subr.mxu0 0.0
      %403 = vmatpush1.msra.mxu0 0.0
      %404 = vmatprep.subr.mxu0 0.0
      %405 = vmatpush1.msra.mxu0 0.0
      %406 = vmatprep.subr.mxu0 0.0
      %407 = vmatpush1.msra.mxu0 0.0
      %408 = vmatprep.subr.mxu0 0.0
      %409 = vmatpush1.msra.mxu0 0.0
      %410 = vmatprep.subr.mxu0 0.0
      %411 = vmatpush1.msra.mxu0 0.0
      %412 = vmatprep.subr.mxu0 0.0
      %413 = vmatpush1.msra.mxu0 0.0
      %414 = vmatprep.subr.mxu0 0.0
      %415 = vmatpush1.msra.mxu0 0.0
      %416 = vmatprep.subr.mxu0 0.0
      %417 = vmatpush1.msra.mxu0 0.0
      %418 = vmatprep.subr.mxu0 0.0
      %419 = vmatpush1.msra.mxu0 0.0
      %420 = vmatprep.subr.mxu0 0.0
      %421 = vmatpush1.msra.mxu0 0.0
      %422 = vmatprep.subr.mxu0 0.0
      %423 = vmatpush1.msra.mxu0 0.0
      %424 = vmatprep.subr.mxu0 0.0
      %425 = vmatpush1.msra.mxu0 0.0
      %426 = vmatprep.subr.mxu0 0.0
      %427 = vmatpush1.msra.mxu0 0.0
      %428 = vmatprep.subr.mxu0 0.0
      %429 = vmatpush1.msra.mxu0 0.0
      %430 = vmatprep.subr.mxu0 0.0
      %431 = vmatpush1.msra.mxu0 0.0
      %432 = vmatprep.subr.mxu0 0.0
      %433 = vmatpush1.msra.mxu0 0.0
      %434 = vmatprep.subr.mxu0 0.0
      %435 = vmatpush1.msra.mxu0 0.0
      %436 = vmatprep.subr.mxu0 0.0
      %437 = vmatpush1.msra.mxu0 0.0
      %438 = vmatprep.subr.mxu0 0.0
      %439 = vmatpush1.msra.mxu0 0.0
      %440 = vmatprep.subr.mxu0 0.0
      %441 = vmatpush1.msra.mxu0 0.0
      %442 = vmatprep.subr.mxu0 0.0
      %443 = vmatpush1.msra.mxu0 0.0
      %444 = vmatprep.subr.mxu0 0.0
      %445 = vmatpush1.msra.mxu0 0.0
      %446 = vmatprep.subr.mxu0 0.0
      %447 = vmatpush1.msra.mxu0 0.0
      %448 = vmatprep.subr.mxu0 0.0
      %449 = vmatpush1.msra.mxu0 0.0
      %450 = vmatprep.subr.mxu0 0.0
      %451 = vmatpush1.msra.mxu0 0.0
      %452 = vmatprep.subr.mxu0 0.0
      %453 = vmatpush1.msra.mxu0 0.0
      %454 = vmatprep.subr.mxu0 0.0
      %455 = vmatpush1.msra.mxu0 0.0
      %456 = vmatprep.subr.mxu0 0.0
      %457 = vmatpush1.msra.mxu0 0.0
      %458 = vmatprep.mubr.f32.mxu0 0.0
      %459 = vmatmul.mubr.f32.gmra.mrb[0].mxu0 %v392
      %v460 = vpop.f32.mrb[0].mxu0
      %v461 = vadd.f32 0.0, %v460
      %v462 = vpop.f32.mrb[0].mxu0
      %463 = vdwg.mxu0
      %v464 = vmul.f32 %v388, %v388
      %v465 = vsub.f32 %v461, %v464
      %v466 = vmax.f32 %v465, 0.0
      %v467 = vadd.f32 %v466, 1e-05
      %v468 = vrsqrt.pop %v467
      %v469 = vld [vmem:[%s2] sm:$0x1]
      %v470 = vmul.f32 %v469, %v468
      %v471 = vld [vmem:[%s3] sm:$0x1]
      %v472 = vmul.f32 %v388, %v470
      %v473 = vsub.f32 %v471, %v472
      %v475 = vlaneseq
      %v476 = vshrl.u32 %v475, 7
      %v477 = vsub.s32 0, %v476
      %v478 = vrot.slane %v470, %v477
      %v480 = vmul.f32 %v252, %v478
      %v481 = vmul.f32 %v253, %v478
      %v482 = vmul.f32 %v254, %v478
      %v483 = vmul.f32 %v255, %v478
      %v484 = vmul.f32 %v256, %v478
      %v485 = vmul.f32 %v257, %v478
      %v486 = vmul.f32 %v258, %v478
      %v487 = vmul.f32 %v259, %v478
      %v489 = vlaneseq
      %v490 = vshrl.u32 %v489, 7
      %v491 = vsub.s32 0, %v490
      %v492 = vrot.slane %v473, %v491
      %v494 = vadd.f32 %v480, %v492
      %v495 = vadd.f32 %v481, %v492
      %v496 = vadd.f32 %v482, %v492
      %v497 = vadd.f32 %v483, %v492
      %v498 = vadd.f32 %v484, %v492
      %v499 = vadd.f32 %v485, %v492
      %v500 = vadd.f32 %v486, %v492
      %v501 = vadd.f32 %v487, %v492
      %v502 = vmax.f32 %v494, 0.0
      %v503 = vmax.f32 %v495, 0.0
      %v504 = vmax.f32 %v496, 0.0
      %v505 = vmax.f32 %v497, 0.0
      %v506 = vmax.f32 %v498, 0.0
      %v507 = vmax.f32 %v499, 0.0
      %v508 = vmax.f32 %v500, 0.0
      %v509 = vmax.f32 %v501, 0.0
      %v510 = vld [vmem:[%s4] sm:$0xff]
      %v511 = vld [vmem:[%s4 + $0x8] sm:$0xff]
      %v512 = vld [vmem:[%s4 + $0x10] sm:$0xff]
      %v513 = vld [vmem:[%s4 + $0x18] sm:$0xff]
      %v514 = vld [vmem:[%s5] sm:$0x1]
      %v516 = vlaneseq
      %v517 = vshrl.u32 %v516, 7
      %v518 = vsub.s32 0, %v517
      %v519 = vrot.slane %v514, %v518
      %v522 = vsel %vm260, %v502, 0
      %v525 = vsel %vm260, %v503, 0
      %v528 = vsel %vm260, %v504, 0
      %v531 = vsel %vm260, %v505, 0
      %v534 = vsel %vm260, %v506, 0
      %v537 = vsel %vm260, %v507, 0
      %v540 = vsel %vm260, %v508, 0
      %v543 = vsel %vm260, %v509, 0
      %545 = vmatprep.subr.mxu0 0.0
      %546 = vmatpush1.msra.mxu0 %v510
      %547 = vmatprep.subr.mxu0 0.0
      %548 = vmatpush1.msra.mxu0 %v511
      %549 = vmatprep.subr.mxu0 0.0
      %550 = vmatpush1.msra.mxu0 %v512
      %551 = vmatprep.subr.mxu0 0.0
      %552 = vmatpush1.msra.mxu0 %v513
      %553 = vmatprep.subr.mxu0 0.0
      %554 = vmatpush1.msra.mxu0 0.0
      %555 = vmatprep.subr.mxu0 0.0
      %556 = vmatpush1.msra.mxu0 0.0
      %557 = vmatprep.subr.mxu0 0.0
      %558 = vmatpush1.msra.mxu0 0.0
      %559 = vmatprep.subr.mxu0 0.0
      %560 = vmatpush1.msra.mxu0 0.0
      %561 = vmatprep.subr.mxu0 0.0
      %562 = vmatpush1.msra.mxu0 0.0
      %563 = vmatprep.subr.mxu0 0.0
      %564 = vmatpush1.msra.mxu0 0.0
      %565 = vmatprep.subr.mxu0 0.0
      %566 = vmatpush1.msra.mxu0 0.0
      %567 = vmatprep.subr.mxu0 0.0
      %568 = vmatpush1.msra.mxu0 0.0
      %569 = vmatprep.subr.mxu0 0.0
      %570 = vmatpush1.msra.mxu0 0.0
      %571 = vmatprep.subr.mxu0 0.0
      %572 = vmatpush1.msra.mxu0 0.0
      %573 = vmatprep.subr.mxu0 0.0
      %574 = vmatpush1.msra.mxu0 0.0
      %575 = vmatprep.subr.mxu0 0.0
      %576 = vmatpush1.msra.mxu0 0.0
      %577 = vmatprep.subr.mxu0 0.0
      %578 = vmatpush1.msra.mxu0 0.0
      %579 = vmatprep.subr.mxu0 0.0
      %580 = vmatpush1.msra.mxu0 0.0
      %581 = vmatprep.subr.mxu0 0.0
      %582 = vmatpush1.msra.mxu0 0.0
      %583 = vmatprep.subr.mxu0 0.0
      %584 = vmatpush1.msra.mxu0 0.0
      %585 = vmatprep.subr.mxu0 0.0
      %586 = vmatpush1.msra.mxu0 0.0
      %587 = vmatprep.subr.mxu0 0.0
      %588 = vmatpush1.msra.mxu0 0.0
      %589 = vmatprep.subr.mxu0 0.0
      %590 = vmatpush1.msra.mxu0 0.0
      %591 = vmatprep.subr.mxu0 0.0
      %592 = vmatpush1.msra.mxu0 0.0
      %593 = vmatprep.subr.mxu0 0.0
      %594 = vmatpush1.msra.mxu0 0.0
      %595 = vmatprep.subr.mxu0 0.0
      %596 = vmatpush1.msra.mxu0 0.0
      %597 = vmatprep.subr.mxu0 0.0
      %598 = vmatpush1.msra.mxu0 0.0
      %599 = vmatprep.subr.mxu0 0.0
      %600 = vmatpush1.msra.mxu0 0.0
      %601 = vmatprep.subr.mxu0 0.0
      %602 = vmatpush1.msra.mxu0 0.0
      %603 = vmatprep.subr.mxu0 0.0
      %604 = vmatpush1.msra.mxu0 0.0
      %605 = vmatprep.subr.mxu0 0.0
      %606 = vmatpush1.msra.mxu0 0.0
      %607 = vmatprep.subr.mxu0 0.0
      %608 = vmatpush1.msra.mxu0 0.0
      %609 = vmatprep.mubr.f32.mxu0 0.0
      %610 = vmatmul.mubr.f32.gmra.mrb[0].mxu0 %v522
      %v611 = vpop.f32.mrb[0].mxu0
      %v612 = vadd.f32 %v519, %v611
      %v613 = vpop.f32.mrb[0].mxu0
      %614 = vmatprep.mubr.f32.mxu0 0.0
      %615 = vmatmul.mubr.f32.gmra.mrb[0].mxu0 %v525
      %v616 = vpop.f32.mrb[0].mxu0
      %v617 = vadd.f32 %v519, %v616
      %v618 = vpop.f32.mrb[0].mxu0
      %619 = vmatprep.mubr.f32.mxu0 0.0
      %620 = vmatmul.mubr.f32.gmra.mrb[0].mxu0 %v528
      %v621 = vpop.f32.mrb[0].mxu0
      %v622 = vadd.f32 %v519, %v621
      %v623 = vpop.f32.mrb[0].mxu0
      %624 = vmatprep.mubr.f32.mxu0 0.0
      %625 = vmatmul.mubr.f32.gmra.mrb[0].mxu0 %v531
      %v626 = vpop.f32.mrb[0].mxu0
      %v627 = vadd.f32 %v519, %v626
      %v628 = vpop.f32.mrb[0].mxu0
      %629 = vmatprep.mubr.f32.mxu0 0.0
      %630 = vmatmul.mubr.f32.gmra.mrb[0].mxu0 %v534
      %v631 = vpop.f32.mrb[0].mxu0
      %v632 = vadd.f32 %v519, %v631
      %v633 = vpop.f32.mrb[0].mxu0
      %634 = vmatprep.mubr.f32.mxu0 0.0
      %635 = vmatmul.mubr.f32.gmra.mrb[0].mxu0 %v537
      %v636 = vpop.f32.mrb[0].mxu0
      %v637 = vadd.f32 %v519, %v636
      %v638 = vpop.f32.mrb[0].mxu0
      %639 = vmatprep.mubr.f32.mxu0 0.0
      %640 = vmatmul.mubr.f32.gmra.mrb[0].mxu0 %v540
      %v641 = vpop.f32.mrb[0].mxu0
      %v642 = vadd.f32 %v519, %v641
      %v643 = vpop.f32.mrb[0].mxu0
      %644 = vmatprep.mubr.f32.mxu0 0.0
      %645 = vmatmul.mubr.f32.gmra.mrb[0].mxu0 %v543
      %v646 = vpop.f32.mrb[0].mxu0
      %v647 = vadd.f32 %v519, %v646
      %v648 = vpop.f32.mrb[0].mxu0
      %649 = vdwg.mxu0
      %vm650 = vcmask 64512
      %651 = vst.msk [vmem:[%s251] sm:$0xff] %vm650, %v612
      %652 = vst.msk [vmem:[%s251 + $0x8] sm:$0xff] %vm650, %v617
      %653 = vst.msk [vmem:[%s251 + $0x10] sm:$0xff] %vm650, %v622
      %654 = vst.msk [vmem:[%s251 + $0x18] sm:$0xff] %vm650, %v627
      %655 = vst.msk [vmem:[%s251 + $0x20] sm:$0xff] %vm650, %v632
      %656 = vst.msk [vmem:[%s251 + $0x28] sm:$0xff] %vm650, %v637
      %657 = vst.msk [vmem:[%s251 + $0x30] sm:$0xff] %vm650, %v642
      %658 = vst.msk [vmem:[%s251 + $0x38] sm:$0xff] %vm650, %v647
      %p659 = scmp.lt.s32.totalorder %s17, 1
      %s660 = scalar_select %p659, %s17, 1
      %s661 = smul.addr %s660, 8
      %s662 = smul.addr %s661, 8
      %s663 = scalar_lea.vmem %s6, %s662
      // Predicated region
      $region45: #{tpu_custom_call.1} parent=43 // pred_check
        %p664 = pneg %p166
      $region46: #{tpu_custom_call.1} parent=43 // pred_check_branch
        %666 = sbr.rel (%p664) target = $region48
      $region47: #{tpu_custom_call.1} parent=43 // pred_region
        _
      $region48: #{tpu_custom_call.1} parent=43 // pred_fallthru
        _
    $region44: #{tpu_custom_call.1} parent=5 // pred_fallthru
      _
    %p667 = scmp.le.s32.totalorder 2, %s12
    // Predicated region
    $region49: #{tpu_custom_call.1} parent=5 // pred_check
      %p668 = pneg %p667
    $region50: #{tpu_custom_call.1} parent=5 // pred_check_branch
      %670 = sbr.rel (%p668) target = $region52
    $region51: #{tpu_custom_call.1} parent=5 // pred_region
      %s671 = ssub.s32 %s12, 2
      // Predicated region
      $region53: #{tpu_custom_call.1} parent=51 // pred_check
        %p672 = pneg %p172
      $region54: #{tpu_custom_call.1} parent=51 // pred_check_branch
        %674 = sbr.rel (%p672) target = $region56
      $region55: #{tpu_custom_call.1} parent=51 // pred_region
        %p675 = scmp.lt.s32.totalorder %s18, 1
        %s676 = scalar_select %p675, %s18, 1
        %s677 = smul.addr %s676, 8
        %s678 = smul.addr %s677, 8
        %s679 = scalar_lea.vmem %s6, %s678
      $region56: #{tpu_custom_call.1} parent=51 // pred_fallthru
        _
    $region52: #{tpu_custom_call.1} parent=5 // pred_fallthru
      _
  $region6: #{tpu_custom_call.1} parent=0 // loop_footer
    %s16 = sadd.s32 1, %s12
  $region7: #{tpu_custom_call.1} parent=0 // loop_footer_branch
    %11 = sbr.rel target = $region3
  $region8: #{tpu_custom_call.1} parent=0 // loop_exit
    _

</llo_original>
